<compile_context>
chip_gen: v7x
topology: tpu7x:2x2x1
jax: 0.10.0
libtpu: 0.0.40
codegen_flags: <defaults>
</compile_context>

<pallas_src>
import math

import jax
import jax.numpy as jnp
from jax.experimental import pallas as pl
from jax.experimental.pallas import tpu as pltpu


def _round_up(x, m):
    return ((x + m - 1) // m) * m


def _linear_kernel(x_ref, w_ref, b_ref, o_ref, acc_ref):
    # x_ref: (tm, tk), w_ref: (tk, tn), b_ref: (1, tn), o_ref: (tm, tn), acc_ref: (tm, tn) f32
    k = pl.program_id(2)

    @pl.when(k == 0)
    def _():
        acc_ref[...] = jnp.zeros_like(acc_ref)

    acc_ref[...] += jnp.dot(
        x_ref[...], w_ref[...], preferred_element_type=jnp.float32
    )

    @pl.when(k == pl.num_programs(2) - 1)
    def _():
        # Bias add fused into the finalize step (rides a free VPU slot under the MXU work).
        o_ref[...] = (acc_ref[...] + b_ref[...]).astype(o_ref.dtype)


def custom_linear(x, weights, bias=None, *, tm=512, tn=512, tk=512):
    """Computes x @ weights + bias with a tiled Pallas TPU kernel.

    Tiles: M tiled by tm (multiple of 8), N by tn and K by tk (multiples of 128).
    Inputs are zero-padded in the wrapper so every tile is full and lane-dense;
    the result is sliced back to (M, N). Default 512^3 f32 tiles use ~7 MiB of
    VMEM (double-buffered), which fits v5e/v6e/v7x scoped VMEM comfortably.
    """
    M, K = x.shape
    K2, N = weights.shape
    assert K == K2, "in_features mismatch"
    out_dtype = x.dtype

    # Effective hardware-aligned tile sizes, clamped to the (padded) problem size.
    tm_e = min(tm, _round_up(M, 8))      # sublane-aligned for f32
    tn_e = min(tn, _round_up(N, 128))    # lane-dense output tiles (avoid masked vst)
    tk_e = min(tk, _round_up(K, 128))

    Mp = _round_up(M, tm_e)
    Np = _round_up(N, tn_e)
    Kp = _round_up(K, tk_e)

    # Zero padding: padded K contributes 0 to the accumulation; padded M/N rows/cols
    # are sliced away below, so semantics match the reference exactly.
    xp = jnp.pad(x, ((0, Mp - M), (0, Kp - K)))
    wp = jnp.pad(weights, ((0, Kp - K), (0, Np - N)))
    if bias is None:
        bp = jnp.zeros((1, Np), jnp.float32)
    else:
        bp = jnp.pad(bias.astype(jnp.float32), (0, Np - N)).reshape(1, Np)

    grid = (Mp // tm_e, Np // tn_e, Kp // tk_e)

    in_itemsize = jnp.dtype(x.dtype).itemsize
    out_itemsize = jnp.dtype(out_dtype).itemsize
    # Double-buffered x/W/out tiles + f32 accumulator + bias tile, with 2x headroom.
    vmem_bytes = (
        2 * (tm_e * tk_e + tk_e * tn_e) * in_itemsize
        + 2 * tm_e * tn_e * out_itemsize
        + tm_e * tn_e * 4
        + 2 * tn_e * 4
    )
    vmem_limit = int(min(64 * 1024 * 1024, max(2 * vmem_bytes, 4 * 1024 * 1024)))

    cost = pl.CostEstimate(
        flops=2 * Mp * Np * Kp,
        bytes_accessed=(Mp * Kp + Kp * Np + Np) * in_itemsize + Mp * Np * out_itemsize,
        transcendentals=0,
    )

    out_padded = pl.pallas_call(
        _linear_kernel,
        out_shape=jax.ShapeDtypeStruct((Mp, Np), out_dtype),
        grid_spec=pltpu.PrefetchScalarGridSpec(
            num_scalar_prefetch=0,
            grid=grid,
            in_specs=[
                pl.BlockSpec((tm_e, tk_e), lambda i, j, k: (i, k)),
                pl.BlockSpec((tk_e, tn_e), lambda i, j, k: (k, j)),
                pl.BlockSpec((1, tn_e), lambda i, j, k: (0, j)),
            ],
            out_specs=pl.BlockSpec((tm_e, tn_e), lambda i, j, k: (i, j)),
            scratch_shapes=[pltpu.VMEM((tm_e, tn_e), jnp.float32)],
        ),
        compiler_params=pltpu.CompilerParams(
            dimension_semantics=("parallel", "parallel", "arbitrary"),
            vmem_limit_bytes=vmem_limit,
        ),
        cost_estimate=cost,
    )(xp, wp, bp)

    return out_padded[:M, :N]


def init_params(key, in_features, out_features, use_bias=True):
    """Deterministic init matching CustomLinearLayer.reset_parameters math.

    The module stores weights as (in_features, out_features); PyTorch's
    _calculate_fan_in_and_fan_out on that tensor gives fan_in = out_features
    (dim 1), which is what both the kaiming_uniform_ and the bias bound use.
    """
    kw, kb = jax.random.split(key)
    a = math.sqrt(in_features)
    gain = math.sqrt(2.0 / (1.0 + a * a))
    fan_in = out_features  # dim 1 of the (in, out) weight, per PyTorch's fan calc
    bound_w = math.sqrt(3.0) * gain / math.sqrt(fan_in)
    weights = jax.random.uniform(
        kw, (in_features, out_features), jnp.float32, -bound_w, bound_w
    )
    bias = None
    if use_bias:
        bound_b = 1.0 / math.sqrt(fan_in)
        bias = jax.random.uniform(
            kb, (out_features,), jnp.float32, -bound_b, bound_b
        )
    return weights, bias


if __name__ == "__main__":
    key = jax.random.PRNGKey(0)
    kx, kp = jax.random.split(key)

    # Small shapes consistent with the module's forward (odd batch exercises the
    # tail/padding path; N=64 exercises lane-padding to 128).
    batch, in_features, out_features = 18, 32, 64
    x = jax.random.normal(kx, (batch, in_features), jnp.float32)
    weights, bias = init_params(kp, in_features, out_features)

    out = custom_linear(x, weights, bias)
    out = jax.block_until_ready(out)

    # Sanity check against plain JAX reference.
    ref = x @ weights + bias
    assert out.shape == (batch, out_features)
    assert jnp.allclose(out, ref, atol=1e-5, rtol=1e-5)

    # Also check the no-bias path supported by the module.
    out_nb = jax.block_until_ready(custom_linear(x, weights, None))
    assert jnp.allclose(out_nb, x @ weights, atol=1e-5, rtol=1e-5)

    print("KERNEL_OK")
</pallas_src>

<mosaic_0001>
module attributes {stable_mosaic.version = 11 : i64} {
  func.func @_linear_kernel(%arg0: i32, %arg1: i32, %arg2: i32, %arg3: memref<24x128xf32, #tpu.memory_space<vmem>>, %arg4: memref<128x128xf32, #tpu.memory_space<vmem>>, %arg5: memref<1x128xf32, #tpu.memory_space<vmem>>, %arg6: memref<24x128xf32, #tpu.memory_space<vmem>>, %arg7: memref<24x128xf32, #tpu.memory_space<vmem>>) attributes {dimension_semantics = [#tpu.dimension_semantics<parallel>, #tpu.dimension_semantics<parallel>, #tpu.dimension_semantics<arbitrary>], iteration_bounds = array<i64: 1, 1, 1>, scalar_prefetch = 0 : i64, scratch_operands = 1 : i64, tpu.core_type = #tpu.core_type<tc>, window_params = [{transform_indices = @transform_0, window_bounds = array<i64: 24, 128>}, {transform_indices = @transform_1, window_bounds = array<i64: 128, 128>}, {transform_indices = @transform_2, window_bounds = array<i64: 1, 128>}, {transform_indices = @transform_3, window_bounds = array<i64: 24, 128>}]} {
    %c0_i32 = arith.constant 0 : i32
    %0 = arith.cmpi eq, %arg2, %c0_i32 : i32
    %1 = arith.extui %0 : i1 to i32
    %c0_i32_0 = arith.constant 0 : i32
    %2 = arith.cmpi ne, %1, %c0_i32_0 : i32
    scf.if %2 {
      %cst_10 = arith.constant 0.000000e+00 : f32
      %12 = vector.broadcast %cst_10 : f32 to vector<24x128xf32>
      %c0_11 = arith.constant 0 : index
      %c0_12 = arith.constant 0 : index
      %13 = vector.load %arg7[%c0_11, %c0_12] : memref<24x128xf32, #tpu.memory_space<vmem>>, vector<24x128xf32>
      tpu.vector_store %arg7[%c0_11, %c0_12], %12 {strides = array<i32>} : memref<24x128xf32, #tpu.memory_space<vmem>>, vector<24x128xf32>,
    } else {
    }
    %c0 = arith.constant 0 : index
    %c0_1 = arith.constant 0 : index
    %3 = vector.load %arg7[%c0, %c0_1] : memref<24x128xf32, #tpu.memory_space<vmem>>, vector<24x128xf32>
    %c0_2 = arith.constant 0 : index
    %c0_3 = arith.constant 0 : index
    %4 = vector.load %arg3[%c0_2, %c0_3] : memref<24x128xf32, #tpu.memory_space<vmem>>, vector<24x128xf32>
    %c0_4 = arith.constant 0 : index
    %c0_5 = arith.constant 0 : index
    %5 = vector.load %arg4[%c0_4, %c0_5] : memref<128x128xf32, #tpu.memory_space<vmem>>, vector<128x128xf32>
    %cst = arith.constant dense<0.000000e+00> : vector<24x128xf32>
    %6 = tpu.matmul %4, %5, %cst {dimension_numbers = #tpu.dot_dimension_numbers<[1], [0], [0], [1], [0, 0, 1, 1], [], []>} : vector<24x128xf32>, vector<128x128xf32>, vector<24x128xf32> -> vector<24x128xf32>
    %7 = arith.addf %3, %6 : vector<24x128xf32>
    %c0_6 = arith.constant 0 : index
    %c0_7 = arith.constant 0 : index
    %8 = vector.load %arg7[%c0_6, %c0_7] : memref<24x128xf32, #tpu.memory_space<vmem>>, vector<24x128xf32>
    tpu.vector_store %arg7[%c0_6, %c0_7], %7 {strides = array<i32>} : memref<24x128xf32, #tpu.memory_space<vmem>>, vector<24x128xf32>,
    %c0_i32_8 = arith.constant 0 : i32
    %9 = arith.cmpi eq, %arg2, %c0_i32_8 : i32
    %10 = arith.extui %9 : i1 to i32
    %c0_i32_9 = arith.constant 0 : i32
    %11 = arith.cmpi ne, %10, %c0_i32_9 : i32
    scf.if %11 {
      %c0_10 = arith.constant 0 : index
      %c0_11 = arith.constant 0 : index
      %12 = vector.load %arg7[%c0_10, %c0_11] : memref<24x128xf32, #tpu.memory_space<vmem>>, vector<24x128xf32>
      %c0_12 = arith.constant 0 : index
      %c0_13 = arith.constant 0 : index
      %13 = vector.load %arg5[%c0_12, %c0_13] : memref<1x128xf32, #tpu.memory_space<vmem>>, vector<1x128xf32>
      %14 = vector.broadcast %13 : vector<1x128xf32> to vector<24x128xf32>
      %15 = arith.addf %12, %14 : vector<24x128xf32>
      %c0_14 = arith.constant 0 : index
      %c0_15 = arith.constant 0 : index
      %16 = vector.load %arg6[%c0_14, %c0_15] : memref<24x128xf32, #tpu.memory_space<vmem>>, vector<24x128xf32>
      tpu.vector_store %arg6[%c0_14, %c0_15], %15 {strides = array<i32>} : memref<24x128xf32, #tpu.memory_space<vmem>>, vector<24x128xf32>,
    } else {
    }
    return
  }
  func.func @transform_0(%arg0: i32, %arg1: i32, %arg2: i32) -> (i32, i32) {
    %c0_i32 = arith.constant 0 : i32
    return %arg0, %arg2 : i32, i32
  }
  func.func @transform_1(%arg0: i32, %arg1: i32, %arg2: i32) -> (i32, i32) {
    %c0_i32 = arith.constant 0 : i32
    return %arg2, %arg1 : i32, i32
  }
  func.func @transform_2(%arg0: i32, %arg1: i32, %arg2: i32) -> (i32, i32) {
    %c0_i32 = arith.constant 0 : i32
    %c0_i32_0 = arith.constant 0 : i32
    return %c0_i32, %arg1 : i32, i32
  }
  func.func @transform_3(%arg0: i32, %arg1: i32, %arg2: i32) -> (i32, i32) {
    %c0_i32 = arith.constant 0 : i32
    return %arg0, %arg1 : i32, i32
  }
}

</mosaic_0001>

<llo_original>
// kernel: tpu_custom_call.1
$region0: #{tpu_custom_call.1}
  #allocation0 [shape = 'u32[]', space=smem, size = 0x4, offset = 0x4, fixed_abs, tag = 'smem constant byte address 0x4 - core index']
  #allocation1 [shape = 'u32[144,128]{1,0:T(1,128)}', space=vmem, size = 0x12000, scoped, tag = 'internal scratch']
  #allocation2 [shape = 'f32[24,128]{1,0:T(8,128)}', space=vmem, size = 0x3000, scoped, tag = 'scratch operand']
  %s0 = inlined_call_operand.hbm [shape: f32[24,128], index: 0, kind: input, shape index: {}]
  %s1 = inlined_call_operand.hbm [shape: f32[128,128], index: 1, kind: input, shape index: {}]
  %s2 = inlined_call_operand.vmem [shape: f32[1,128], index: 2, kind: input, shape index: {}]
  %s3 = inlined_call_operand.hbm [shape: f32[24,128], index: 3, kind: output, shape index: {}]
  %s4 = sld [smem:[#allocation0]]
  $region38: #{tpu_custom_call.1} parent=0
    _
  %s6 = ssub.s32 1, %s4
  %s7 = scalar_select 0, %s6, %s4
  $region1: #{tpu_custom_call.1} parent=0
    #allocation3 [shape = 'u8[12288]{0}', space=vmem, size = 0x3000, scoped, tag = 'input window, operand 0, single buffered']
    #allocation4 [shape = 's32[1]{0}', space=sflag, size = 0x4, scoped, tag = 'scoped memory for tpu_custom_call.1']
    #allocation5 [shape = 's32[1]{0}', space=sflag, size = 0x4, scoped, tag = 'scoped memory for tpu_custom_call.1']
    #allocation6 [shape = 'u8[65536]{0}', space=vmem, size = 0x10000, scoped, tag = 'input window, operand 1, single buffered']
    #allocation7 [shape = 's32[1]{0}', space=sflag, size = 0x4, scoped, tag = 'scoped memory for tpu_custom_call.1']
    #allocation8 [shape = 'u8[12288]{0}', space=vmem, size = 0x3000, scoped, tag = 'output window, operand 0, single buffered']
    %8 = vsyncpa [#allocation4], 0
    %9 = vsyncpa [#allocation7], 0
    %10 = vsyncpa [#allocation5], 0
    // Predicated region
    $region2: #{tpu_custom_call.1} parent=1 // pred_check
      _
    $region3: #{tpu_custom_call.1} parent=1 // pred_check_branch
      %12 = sbr.rel (0) target = $region5
    $region4: #{tpu_custom_call.1} parent=1 // pred_region
      %s14 = ssub.s32 384, 384
      %15 = vsyncadd [#allocation4], %s14
      %s16 = sshll.u32 [#allocation3], 4
      %s17 = int_to_ptr.vmem [resolvable:$true] %s16
      %22 = dma.hbm_to_vmem [thread:$0]  %s0, 384, %s17, [#allocation4], 128, 128, 8
    $region5: #{tpu_custom_call.1} parent=1 // pred_fallthru
      _
    // Predicated region
    $region6: #{tpu_custom_call.1} parent=1 // pred_check
      _
    $region7: #{tpu_custom_call.1} parent=1 // pred_check_branch
      %24 = sbr.rel (0) target = $region9
    $region8: #{tpu_custom_call.1} parent=1 // pred_region
      %s26 = ssub.s32 2048, 2048
      %27 = vsyncadd [#allocation7], %s26
      %s28 = sshll.u32 [#allocation6], 4
      %s29 = int_to_ptr.vmem [resolvable:$true] %s28
      %34 = dma.hbm_to_vmem [thread:$0]  %s1, 2048, %s29, [#allocation7], 128, 128, 8
    $region9: #{tpu_custom_call.1} parent=1 // pred_fallthru
      _
    // Predicated region
    $region10: #{tpu_custom_call.1} parent=1 // pred_check
      _
    $region11: #{tpu_custom_call.1} parent=1 // pred_check_branch
      %36 = sbr.rel (0) target = $region13
    $region12: #{tpu_custom_call.1} parent=1 // pred_region
      _
    $region13: #{tpu_custom_call.1} parent=1 // pred_fallthru
      _
    // Predicated region
    $region14: #{tpu_custom_call.1} parent=1 // pred_check
      _
    $region15: #{tpu_custom_call.1} parent=1 // pred_check_branch
      %38 = sbr.rel (0) target = $region17
    $region16: #{tpu_custom_call.1} parent=1 // pred_region
      %39 = dma.done [#allocation4], 384
    $region17: #{tpu_custom_call.1} parent=1 // pred_fallthru
      _
    // Predicated region
    $region18: #{tpu_custom_call.1} parent=1 // pred_check
      _
    $region19: #{tpu_custom_call.1} parent=1 // pred_check_branch
      %41 = sbr.rel (0) target = $region21
    $region20: #{tpu_custom_call.1} parent=1 // pred_region
      %42 = dma.done [#allocation7], 2048
    $region21: #{tpu_custom_call.1} parent=1 // pred_fallthru
      _
    %p43 = scmp.eq.s32.totalorder 0, 0
    // Predicated region
    $region22: #{tpu_custom_call.1} parent=1 // pred_check
      %p44 = pneg %p43
    $region23: #{tpu_custom_call.1} parent=1 // pred_check_branch
      %46 = sbr.rel (%p44) target = $region25
    $region24: #{tpu_custom_call.1} parent=1 // pred_region
      %47 = vst [vmem:[#allocation2] sm:$0xff] 0.0
      %48 = vst [vmem:[#allocation2 + $0x8] sm:$0xff] 0.0
      %49 = vst [vmem:[#allocation2 + $0x10] sm:$0xff] 0.0
    $region25: #{tpu_custom_call.1} parent=1 // pred_fallthru
      _
    %v50 = vld [vmem:[#allocation2] sm:$0xff]
    %v51 = vld [vmem:[#allocation2 + $0x8] sm:$0xff]
    %v52 = vld [vmem:[#allocation2 + $0x10] sm:$0xff]
    %v53 = vld [vmem:[#allocation3] sm:$0xff]
    %v54 = vld [vmem:[#allocation3 + $0x8] sm:$0xff]
    %v55 = vld [vmem:[#allocation3 + $0x10] sm:$0xff]
    %v56 = vld [vmem:[#allocation6] sm:$0xff]
    %v57 = vld [vmem:[#allocation6 + $0x8] sm:$0xff]
    %v58 = vld [vmem:[#allocation6 + $0x10] sm:$0xff]
    %v59 = vld [vmem:[#allocation6 + $0x18] sm:$0xff]
    %v60 = vld [vmem:[#allocation6 + $0x20] sm:$0xff]
    %v61 = vld [vmem:[#allocation6 + $0x28] sm:$0xff]
    %v62 = vld [vmem:[#allocation6 + $0x30] sm:$0xff]
    %v63 = vld [vmem:[#allocation6 + $0x38] sm:$0xff]
    %v64 = vld [vmem:[#allocation6 + $0x40] sm:$0xff]
    %v65 = vld [vmem:[#allocation6 + $0x48] sm:$0xff]
    %v66 = vld [vmem:[#allocation6 + $0x50] sm:$0xff]
    %v67 = vld [vmem:[#allocation6 + $0x58] sm:$0xff]
    %v68 = vld [vmem:[#allocation6 + $0x60] sm:$0xff]
    %v69 = vld [vmem:[#allocation6 + $0x68] sm:$0xff]
    %v70 = vld [vmem:[#allocation6 + $0x70] sm:$0xff]
    %v71 = vld [vmem:[#allocation6 + $0x78] sm:$0xff]
    %72 = vmatprep.subr.mxu0 0.0
    %73 = vmatpush1.msra.mxu0 %v56
    %74 = vmatprep.subr.mxu0 0.0
    %75 = vmatpush1.msra.mxu0 %v57
    %76 = vmatprep.subr.mxu0 0.0
    %77 = vmatpush1.msra.mxu0 %v58
    %78 = vmatprep.subr.mxu0 0.0
    %79 = vmatpush1.msra.mxu0 %v59
    %80 = vmatprep.subr.mxu0 0.0
    %81 = vmatpush1.msra.mxu0 %v60
    %82 = vmatprep.subr.mxu0 0.0
    %83 = vmatpush1.msra.mxu0 %v61
    %84 = vmatprep.subr.mxu0 0.0
    %85 = vmatpush1.msra.mxu0 %v62
    %86 = vmatprep.subr.mxu0 0.0
    %87 = vmatpush1.msra.mxu0 %v63
    %88 = vmatprep.subr.mxu0 0.0
    %89 = vmatpush1.msra.mxu0 %v64
    %90 = vmatprep.subr.mxu0 0.0
    %91 = vmatpush1.msra.mxu0 %v65
    %92 = vmatprep.subr.mxu0 0.0
    %93 = vmatpush1.msra.mxu0 %v66
    %94 = vmatprep.subr.mxu0 0.0
    %95 = vmatpush1.msra.mxu0 %v67
    %96 = vmatprep.subr.mxu0 0.0
    %97 = vmatpush1.msra.mxu0 %v68
    %98 = vmatprep.subr.mxu0 0.0
    %99 = vmatpush1.msra.mxu0 %v69
    %100 = vmatprep.subr.mxu0 0.0
    %101 = vmatpush1.msra.mxu0 %v70
    %102 = vmatprep.subr.mxu0 0.0
    %103 = vmatpush1.msra.mxu0 %v71
    %104 = vmatprep.subr.mxu0 0.0
    %105 = vmatpush1.msra.mxu0 0.0
    %106 = vmatprep.subr.mxu0 0.0
    %107 = vmatpush1.msra.mxu0 0.0
    %108 = vmatprep.subr.mxu0 0.0
    %109 = vmatpush1.msra.mxu0 0.0
    %110 = vmatprep.subr.mxu0 0.0
    %111 = vmatpush1.msra.mxu0 0.0
    %112 = vmatprep.subr.mxu0 0.0
    %113 = vmatpush1.msra.mxu0 0.0
    %114 = vmatprep.subr.mxu0 0.0
    %115 = vmatpush1.msra.mxu0 0.0
    %116 = vmatprep.subr.mxu0 0.0
    %117 = vmatpush1.msra.mxu0 0.0
    %118 = vmatprep.subr.mxu0 0.0
    %119 = vmatpush1.msra.mxu0 0.0
    %120 = vmatprep.subr.mxu0 0.0
    %121 = vmatpush1.msra.mxu0 0.0
    %122 = vmatprep.subr.mxu0 0.0
    %123 = vmatpush1.msra.mxu0 0.0
    %124 = vmatprep.subr.mxu0 0.0
    %125 = vmatpush1.msra.mxu0 0.0
    %126 = vmatprep.subr.mxu0 0.0
    %127 = vmatpush1.msra.mxu0 0.0
    %128 = vmatprep.subr.mxu0 0.0
    %129 = vmatpush1.msra.mxu0 0.0
    %130 = vmatprep.subr.mxu0 0.0
    %131 = vmatpush1.msra.mxu0 0.0
    %132 = vmatprep.subr.mxu0 0.0
    %133 = vmatpush1.msra.mxu0 0.0
    %134 = vmatprep.subr.mxu0 0.0
    %135 = vmatpush1.msra.mxu0 0.0
    %136 = vmatprep.mubr.f32.mxu0 0.0
    %137 = vmatmul.mubr.f32.gmra.mrb[0].mxu0 %v53
    %v138 = vpop.f32.mrb[0].mxu0
    %v139 = vadd.f32 0.0, %v138
    %v140 = vpop.f32.mrb[0].mxu0
    %141 = vmatprep.mubr.f32.mxu0 0.0
    %142 = vmatmul.mubr.f32.gmra.mrb[0].mxu0 %v54
    %v143 = vpop.f32.mrb[0].mxu0
    %v144 = vadd.f32 0.0, %v143
    %v145 = vpop.f32.mrb[0].mxu0
    %146 = vmatprep.mubr.f32.mxu0 0.0
    %147 = vmatmul.mubr.f32.gmra.mrb[0].mxu0 %v55
    %v148 = vpop.f32.mrb[0].mxu0
    %v149 = vadd.f32 0.0, %v148
    %v150 = vpop.f32.mrb[0].mxu0
    %151 = vdwg.mxu0
    %v152 = vadd.f32 %v50, %v139
    %v153 = vadd.f32 %v51, %v144
    %v154 = vadd.f32 %v52, %v149
    %155 = vst [vmem:[#allocation2] sm:$0xff] %v152
    %156 = vst [vmem:[#allocation2 + $0x8] sm:$0xff] %v153
    %157 = vst [vmem:[#allocation2 + $0x10] sm:$0xff] %v154
    // Predicated region
    $region26: #{tpu_custom_call.1} parent=1 // pred_check
      %p158 = pneg %p43
    $region27: #{tpu_custom_call.1} parent=1 // pred_check_branch
      %160 = sbr.rel (%p158) target = $region29
    $region28: #{tpu_custom_call.1} parent=1 // pred_region
      %v161 = vld [vmem:[#allocation2] sm:$0xff]
      %v162 = vld [vmem:[#allocation2 + $0x8] sm:$0xff]
      %v163 = vld [vmem:[#allocation2 + $0x10] sm:$0xff]
      %v164 = vld [vmem:[%s2] sm:$0x1]
      %v166 = vlaneseq
      %v167 = vshrl.u32 %v166, 7
      %v168 = vsub.s32 0, %v167
      %v169 = vrot.slane %v164, %v168
      %v171 = vadd.f32 %v161, %v169
      %v172 = vadd.f32 %v162, %v169
      %v173 = vadd.f32 %v163, %v169
      %174 = vst [vmem:[#allocation8] sm:$0xff] %v171
      %175 = vst [vmem:[#allocation8 + $0x8] sm:$0xff] %v172
      %176 = vst [vmem:[#allocation8 + $0x10] sm:$0xff] %v173
    $region29: #{tpu_custom_call.1} parent=1 // pred_fallthru
      _
    // Predicated region
    $region30: #{tpu_custom_call.1} parent=1 // pred_check
      _
    $region31: #{tpu_custom_call.1} parent=1 // pred_check_branch
      %178 = sbr.rel (0) target = $region33
    $region32: #{tpu_custom_call.1} parent=1 // pred_region
      %s180 = ssub.s32 384, 384
      %181 = vsyncadd [#allocation5], %s180
      %s182 = sshll.u32 [#allocation8], 4
      %s183 = int_to_ptr.vmem [resolvable:$true] %s182
      %188 = dma.vmem_to_hbm [thread:$0]  %s183, 384, %s3, [#allocation5], 128, 128, 8
    $region33: #{tpu_custom_call.1} parent=1 // pred_fallthru
      _
    // Predicated region
    $region34: #{tpu_custom_call.1} parent=1 // pred_check
      _
    $region35: #{tpu_custom_call.1} parent=1 // pred_check_branch
      %190 = sbr.rel (0) target = $region37
    $region36: #{tpu_custom_call.1} parent=1 // pred_region
      %191 = dma.done [#allocation5], 384
    $region37: #{tpu_custom_call.1} parent=1 // pred_fallthru
      _
    %192 = vsyncpa [#allocation4], 1
    %193 = vsyncpa [#allocation7], 1
    %194 = vsyncpa [#allocation5], 1

</llo_original>
